<compile_context>
chip_gen: v5e
topology: v5e:2x2
jax: 0.10.0
libtpu: 0.0.40
codegen_flags: <defaults>
</compile_context>

<pallas_src>
import functools

import numpy as np
import jax
import jax.numpy as jnp
from jax import lax
from jax.experimental import pallas as pl
from jax.experimental.pallas import tpu as pltpu

TAU = 2.0
V_TH = 1.0
BN_EPS = 1e-5


# ----------------------------- Pallas kernel --------------------------------

def _ms_mlp_conv_kernel(x_ref, attn_ref, w1_ref, b1_ref, w2_ref, b2_ref,
                        bpost_ref, out_ref, v1_ref, v2_ref, *,
                        res, tau, v_th, t_axis):
    # Per grid step the refs hold:
    #   x_ref    : (..., Cin,  P)  input pixels (channels x pixel-tile)
    #   attn_ref : (..., Cout, P)
    #   w1_ref   : (hidden, Cin)   BN1-folded fc1 weight
    #   b1_ref   : (hidden, 1)     BN1-folded fc1 bias
    #   w2_ref   : (Cout, hidden)  BN2-scale-folded fc2 weight
    #   b2_ref   : (Cout, 1)       BN2-scale-folded fc2 conv bias (pre-attn)
    #   bpost_ref: (Cout, 1)       BN2 shift (post-attn)
    #   out_ref  : (..., Cout, P)
    #   v1_ref   : (Cin,   P) f32  fc1_lif membrane (persists across T)
    #   v2_ref   : (hidden,P) f32  fc2_lif membrane (persists across T)
    t = pl.program_id(t_axis)

    @pl.when(t == 0)
    def _():
        v1_ref[...] = jnp.zeros_like(v1_ref)
        v2_ref[...] = jnp.zeros_like(v2_ref)

    inv_tau = 1.0 / tau
    cin, p = v1_ref.shape
    cout = bpost_ref.shape[0]

    x = x_ref[...].reshape(cin, p).astype(jnp.float32)         # (Cin, P)

    # ---- fc1_lif (decay_input, hard reset to 0) ----
    v1 = v1_ref[...]
    h1 = v1 + (x - v1) * inv_tau
    spk1 = h1 >= v_th
    v1_ref[...] = jnp.where(spk1, 0.0, h1)

    # ---- fc1_conv (1x1) + fc1_bn (BN folded) ----
    y = jnp.dot(w1_ref[...], spk1.astype(w1_ref.dtype),
                preferred_element_type=jnp.float32)             # (hidden, P)
    y = y + b1_ref[...].astype(jnp.float32)
    if res:                                                     # identity residual
        y = y + x

    # ---- fc2_lif ----
    v2 = v2_ref[...]
    h2 = v2 + (y - v2) * inv_tau
    spk2 = h2 >= v_th
    v2_ref[...] = jnp.where(spk2, 0.0, h2)

    # ---- fc2_conv (BN2 scale folded) * attention + BN2 shift ----
    z = jnp.dot(w2_ref[...], spk2.astype(w2_ref.dtype),
                preferred_element_type=jnp.float32)             # (Cout, P)
    z = z + b2_ref[...].astype(jnp.float32)
    z = z * attn_ref[...].reshape(cout, p).astype(jnp.float32)
    z = z + bpost_ref[...].astype(jnp.float32)
    out_ref[...] = z.reshape(out_ref.shape).astype(out_ref.dtype)


# ----------------------------- helpers ---------------------------------------

def _vmem_capacity_bytes():
    """Physical VMEM per TensorCore (64 MiB on v7x, 128 MiB on v5e/v6e)."""
    try:
        cap = int(pltpu.get_tpu_info().vmem_capacity_bytes)
        if cap > 0:
            return cap
    except Exception:
        pass
    return 64 << 20            # conservative fallback (v7x)


def _vmem_limit(est_bytes, cap):
    return int(min(max(est_bytes + (4 << 20), 32 << 20), int(0.9 * cap)))


def _pick_pixel_tile(hw, per_pixel_bytes, pixel_budget_bytes, batch):
    """Largest lane-dense (multiple-of-128) divisor of `hw` fitting the VMEM
    budget; keeps >= 2 pixel tiles when batch == 1 so both v7x TCs get work."""
    if hw % 128 != 0:
        return hw                      # full extent satisfies the (8,128) rule
    cap = max(128, int(pixel_budget_bytes // max(per_pixel_bytes, 1)))
    best = 128
    p = 128
    while p <= hw:
        if hw % p == 0 and p <= cap:
            best = p
        p += 128
    if batch == 1 and best == hw and hw > 128:
        for cand in range(hw - 128, 127, -128):
            if hw % cand == 0:
                best = cand
                break
        if best == hw:
            best = 128
    return best


def fold_params(params, eps=BN_EPS):
    """Fold inference-mode BatchNorms into the 1x1-conv weights/biases."""
    w1, b1c = params["w1"], params["b1"]            # (hidden, Cin), (hidden,)
    g1, be1, m1, var1 = params["bn1"]
    s1 = g1 / jnp.sqrt(var1 + eps)
    w2, b2c = params["w2"], params["b2"]            # (Cout, hidden), (Cout,)
    g2, be2, m2, var2 = params["bn2"]
    s2 = g2 / jnp.sqrt(var2 + eps)
    return {
        "w1": w1 * s1[:, None],
        "b1": s1 * (b1c - m1) + be1,
        "w2": w2 * s2[:, None],                     # BN2 scale folds through the attn-mul
        "b2": s2 * b2c,                             # added BEFORE the attn multiply
        "bpost": be2 - s2 * m2,                     # added AFTER the attn multiply
    }


# ----------------------------- wrapper ---------------------------------------

def ms_mlp_conv_forward(x, x_attention, folded, *, weight_dtype=jnp.bfloat16,
                        out_dtype=jnp.float32, pixel_tile=None,
                        tau=TAU, v_th=V_TH):
    """Fused MS_MLP_Conv forward (eval mode, hook not captured).

    x           : (T, B, Cin,  H, W)  -- pass bf16 to halve HBM read traffic
    x_attention : (T, B, Cout, H, W)
    folded      : output of fold_params (BN folded into the 1x1 convs, f32)
    Returns (T, B, Cout, H, W) in `out_dtype` (bf16 optional for consumers
    that tolerate it).  LIF math and matmul accumulation stay f32 in-kernel.
    """
    T, B, Cin, H, W = x.shape
    hidden = folded["w1"].shape[0]
    Cout = folded["w2"].shape[0]
    assert x_attention.shape == (T, B, Cout, H, W)
    res = (Cin == hidden)
    HW = H * W

    w1 = folded["w1"].astype(weight_dtype)
    w2 = folded["w2"].astype(weight_dtype)
    b1 = folded["b1"].reshape(hidden, 1).astype(jnp.float32)
    b2 = folded["b2"].reshape(Cout, 1).astype(jnp.float32)
    bp = folded["bpost"].reshape(Cout, 1).astype(jnp.float32)

    in_size = jnp.dtype(x.dtype).itemsize
    out_size = jnp.dtype(out_dtype).itemsize
    w_size = jnp.dtype(weight_dtype).itemsize

    # ---- VMEM budget, per generation (v7x only has 64 MiB per TensorCore) ----
    cap = _vmem_capacity_bytes()
    static = 2 * (w_size * (hidden * Cin + Cout * hidden)       # weights (2-buf)
                  + 4 * 128 * (hidden + 2 * Cout))              # lane-padded biases
    per_pixel = (2 * in_size * (Cin + Cout)      # x + attn tiles, double-buffered
                 + 2 * out_size * Cout           # out tile, double-buffered
                 + 4 * (Cin + hidden))           # LIF membranes (f32, single)
    pixel_budget = max(int(0.55 * cap) - static - (2 << 20), 128 * per_pixel)

    fold_batch = (HW % 128 != 0)     # small / odd images: fold B into the lanes

    if not fold_batch:
        # --------- layout (T, B, C, HW): no transpose, lane-dense tiles -------
        xf = x.reshape(T, B, Cin, HW)
        af = x_attention.reshape(T, B, Cout, HW)
        P = pixel_tile or _pick_pixel_tile(HW, per_pixel, pixel_budget, batch=B)
        assert HW % P == 0
        vmem_limit = _vmem_limit(per_pixel * P + static, cap)
        kernel = functools.partial(_ms_mlp_conv_kernel, res=res, tau=tau,
                                   v_th=v_th, t_axis=2)
        out = pl.pallas_call(
            kernel,
            out_shape=jax.ShapeDtypeStruct((T, B, Cout, HW), out_dtype),
            grid=(B, HW // P, T),                      # T innermost (LIF state)
            in_specs=[
                pl.BlockSpec((1, 1, Cin, P), lambda b, p, t: (t, b, 0, p)),
                pl.BlockSpec((1, 1, Cout, P), lambda b, p, t: (t, b, 0, p)),
                pl.BlockSpec((hidden, Cin), lambda b, p, t: (0, 0)),
                pl.BlockSpec((hidden, 1), lambda b, p, t: (0, 0)),
                pl.BlockSpec((Cout, hidden), lambda b, p, t: (0, 0)),
                pl.BlockSpec((Cout, 1), lambda b, p, t: (0, 0)),
                pl.BlockSpec((Cout, 1), lambda b, p, t: (0, 0)),
            ],
            out_specs=pl.BlockSpec((1, 1, Cout, P), lambda b, p, t: (t, b, 0, p)),
            scratch_shapes=[
                pltpu.VMEM((Cin, P), jnp.float32),       # fc1_lif membrane
                pltpu.VMEM((hidden, P), jnp.float32),    # fc2_lif membrane
            ],
            # T must stay last and 'arbitrary' -- membrane scratch carries
            # state across the time axis.
            compiler_params=pltpu.CompilerParams(
                dimension_semantics=("parallel", "parallel", "arbitrary"),
                vmem_limit_bytes=vmem_limit),
        )(xf, af, w1, b1, w2, b2, bp)
        return out.reshape(T, B, Cout, H, W)

    # --------- layout (T, C, B*HW): fold batch into lanes, pad to 128 --------
    BHW = B * HW
    L = ((BHW + 127) // 128) * 128
    xf = x.reshape(T, B, Cin, HW).transpose(0, 2, 1, 3).reshape(T, Cin, BHW)
    af = x_attention.reshape(T, B, Cout, HW).transpose(0, 2, 1, 3).reshape(T, Cout, BHW)
    if L != BHW:
        xf = jnp.pad(xf, ((0, 0), (0, 0), (0, L - BHW)))
        af = jnp.pad(af, ((0, 0), (0, 0), (0, L - BHW)))
    P = pixel_tile or _pick_pixel_tile(L, per_pixel, pixel_budget, batch=1)
    assert L % P == 0
    vmem_limit = _vmem_limit(per_pixel * P + static, cap)
    kernel = functools.partial(_ms_mlp_conv_kernel, res=res, tau=tau,
                               v_th=v_th, t_axis=1)
    out = pl.pallas_call(
        kernel,
        out_shape=jax.ShapeDtypeStruct((T, Cout, L), out_dtype),
        grid=(L // P, T),                              # T innermost (LIF state)
        in_specs=[
            pl.BlockSpec((1, Cin, P), lambda p, t: (t, 0, p)),
            pl.BlockSpec((1, Cout, P), lambda p, t: (t, 0, p)),
            pl.BlockSpec((hidden, Cin), lambda p, t: (0, 0)),
            pl.BlockSpec((hidden, 1), lambda p, t: (0, 0)),
            pl.BlockSpec((Cout, hidden), lambda p, t: (0, 0)),
            pl.BlockSpec((Cout, 1), lambda p, t: (0, 0)),
            pl.BlockSpec((Cout, 1), lambda p, t: (0, 0)),
        ],
        out_specs=pl.BlockSpec((1, Cout, P), lambda p, t: (t, 0, p)),
        scratch_shapes=[
            pltpu.VMEM((Cin, P), jnp.float32),
            pltpu.VMEM((hidden, P), jnp.float32),
        ],
        compiler_params=pltpu.CompilerParams(
            dimension_semantics=("parallel", "arbitrary"),
            vmem_limit_bytes=vmem_limit),
    )(xf, af, w1, b1, w2, b2, bp)
    out = out[:, :, :BHW].reshape(T, Cout, B, HW).transpose(0, 2, 1, 3)
    return out.reshape(T, B, Cout, H, W)


# ----------------------------- pure-JAX reference ----------------------------

def _lif_scan(x, tau=TAU, v_th=V_TH):
    def step(v, xt):
        h = v + (xt - v) * (1.0 / tau)
        s = (h >= v_th).astype(jnp.float32)
        return h * (1.0 - s), s
    _, s = lax.scan(step, jnp.zeros_like(x[0]), x)
    return s


def ms_mlp_conv_reference(x, x_attention, folded):
    T, B, Cin, H, W = x.shape
    hidden = folded["w1"].shape[0]
    res = (Cin == hidden)
    s1 = _lif_scan(x)
    y = jnp.einsum("oc,tbchw->tbohw", folded["w1"], s1,
                   precision=lax.Precision.HIGHEST)
    y = y + folded["b1"][None, None, :, None, None]
    if res:
        y = y + x
    s2 = _lif_scan(y)
    z = jnp.einsum("oc,tbchw->tbohw", folded["w2"], s2,
                   precision=lax.Precision.HIGHEST)
    z = z + folded["b2"][None, None, :, None, None]
    z = z * x_attention + folded["bpost"][None, None, :, None, None]
    return z


# ----------------------------- param init ------------------------------------

def init_params(key, in_features, hidden_features, out_features):
    ks = jax.random.split(key, 6)

    def bn(k, c):
        k1, k2, k3, k4 = jax.random.split(k, 4)
        gamma = jax.random.uniform(k1, (c,), jnp.float32, 0.5, 1.5)
        beta = jax.random.normal(k2, (c,), jnp.float32) * 0.1
        mean = jax.random.normal(k3, (c,), jnp.float32) * 0.1
        var = jax.random.uniform(k4, (c,), jnp.float32, 0.5, 1.5)
        return gamma, beta, mean, var

    return {
        "w1": jax.random.normal(ks[0], (hidden_features, in_features), jnp.float32) * 0.3,
        "b1": jax.random.normal(ks[1], (hidden_features,), jnp.float32) * 0.1,
        "bn1": bn(ks[2], hidden_features),
        "w2": jax.random.normal(ks[3], (out_features, hidden_features), jnp.float32) * 0.3,
        "b2": jax.random.normal(ks[4], (out_features,), jnp.float32) * 0.1,
        "bn2": bn(ks[5], out_features),
    }


# ----------------------------- main -------------------------------------------

if __name__ == "__main__":

    def check(out, ref, tag, thresh=1e-2):
        err = np.abs(np.asarray(out, dtype=np.float32)
                     - np.asarray(ref, dtype=np.float32))
        bad_frac = float(np.mean(err > thresh))
        mean_err = float(np.mean(err))
        # Tolerate the (rare) near-threshold spike flip from matmul rounding.
        assert bad_frac < 0.01 and mean_err < thresh, \
            f"{tag}: mismatch fraction {bad_frac}, mean abs err {mean_err}"

    def run_case(key, T, B, Cin, hidden, H, W, check_f32=False):
        Cout = Cin                                   # out_features defaults to in_features
        kx, ka, kp = jax.random.split(key, 3)
        x = jax.random.normal(kx, (T, B, Cin, H, W), jnp.float32) * 2.0
        attn = jax.random.normal(ka, (T, B, Cout, H, W), jnp.float32)
        params = init_params(kp, Cin, hidden, Cout)
        folded = fold_params(params)

        # Default fast path: bf16 inputs + bf16 weights, f32 LIF/accumulate.
        # Reference uses the same bf16-rounded inputs/weights so spike
        # decisions line up.
        x16 = x.astype(jnp.bfloat16)
        a16 = attn.astype(jnp.bfloat16)
        folded16 = dict(folded)
        folded16["w1"] = folded["w1"].astype(jnp.bfloat16).astype(jnp.float32)
        folded16["w2"] = folded["w2"].astype(jnp.bfloat16).astype(jnp.float32)
        out16 = jax.block_until_ready(ms_mlp_conv_forward(x16, a16, folded))
        assert out16.shape == (T, B, Cout, H, W), out16.shape
        ref16 = ms_mlp_conv_reference(x16.astype(jnp.float32),
                                      a16.astype(jnp.float32), folded16)
        check(out16, ref16, "bf16")

        # bf16-output variant: identical internal compute, only the final store
        # cast differs.
        outb = jax.block_until_ready(
            ms_mlp_conv_forward(x16, a16, folded, out_dtype=jnp.bfloat16))
        assert np.allclose(np.asarray(outb, np.float32), np.asarray(out16),
                           rtol=2e-2, atol=2e-2), "bf16-out mismatch"

        # f32 debug path (weights + inputs f32).
        if check_f32:
            outf = jax.block_until_ready(
                ms_mlp_conv_forward(x, attn, folded, weight_dtype=jnp.float32))
            check(outf, ms_mlp_conv_reference(x, attn, folded), "f32")

    key = jax.random.PRNGKey(0)
    k1, k2, k3 = jax.random.split(key, 3)
    # residual branch active (in_features == hidden_features), lane-dense HW
    run_case(k1, T=2, B=2, Cin=32, hidden=32, H=16, W=16, check_f32=True)
    # MLP expansion (no residual)
    run_case(k2, T=2, B=2, Cin=32, hidden=64, H=16, W=16)
    # H*W not a multiple of 128 -> batch folded into the lane axis + padding
    run_case(k3, T=2, B=2, Cin=32, hidden=32, H=10, W=10)
    print("KERNEL_OK")
</pallas_src>

<mosaic_0001>
module attributes {stable_mosaic.version = 11 : i64} {
  func.func @_ms_mlp_conv_kernel(%arg0: i32, %arg1: i32, %arg2: i32, %arg3: memref<1x1x32x256xbf16, #tpu.memory_space<vmem>>, %arg4: memref<1x1x32x256xbf16, #tpu.memory_space<vmem>>, %arg5: memref<32x32xbf16, #tpu.memory_space<vmem>>, %arg6: memref<32x1xf32, #tpu.memory_space<vmem>>, %arg7: memref<32x32xbf16, #tpu.memory_space<vmem>>, %arg8: memref<32x1xf32, #tpu.memory_space<vmem>>, %arg9: memref<32x1xf32, #tpu.memory_space<vmem>>, %arg10: memref<1x1x32x256xf32, #tpu.memory_space<vmem>>, %arg11: memref<32x256xf32, #tpu.memory_space<vmem>>, %arg12: memref<32x256xf32, #tpu.memory_space<vmem>>) attributes {dimension_semantics = [#tpu.dimension_semantics<parallel>, #tpu.dimension_semantics<parallel>, #tpu.dimension_semantics<arbitrary>], iteration_bounds = array<i64: 2, 1, 2>, scalar_prefetch = 0 : i64, scratch_operands = 2 : i64, tpu.core_type = #tpu.core_type<tc>, window_params = [{transform_indices = @transform_0, window_bounds = array<i64: 1, 1, 32, 256>}, {transform_indices = @transform_1, window_bounds = array<i64: 1, 1, 32, 256>}, {pipeline_mode = #tpu.pipeline_mode<synchronous>, transform_indices = @transform_2, window_bounds = array<i64: 32, 32>}, {pipeline_mode = #tpu.pipeline_mode<synchronous>, transform_indices = @transform_3, window_bounds = array<i64: 32, 1>}, {pipeline_mode = #tpu.pipeline_mode<synchronous>, transform_indices = @transform_4, window_bounds = array<i64: 32, 32>}, {pipeline_mode = #tpu.pipeline_mode<synchronous>, transform_indices = @transform_5, window_bounds = array<i64: 32, 1>}, {pipeline_mode = #tpu.pipeline_mode<synchronous>, transform_indices = @transform_6, window_bounds = array<i64: 32, 1>}, {transform_indices = @transform_7, window_bounds = array<i64: 1, 1, 32, 256>}]} {
    %c0_i32 = arith.constant 0 : i32
    %0 = arith.cmpi eq, %arg2, %c0_i32 : i32
    %1 = arith.extui %0 : i1 to i32
    %c0_i32_0 = arith.constant 0 : i32
    %2 = arith.cmpi ne, %1, %c0_i32_0 : i32
    scf.if %2 {
      %cst_37 = arith.constant 0.000000e+00 : f32
      %52 = vector.broadcast %cst_37 : f32 to vector<32x256xf32>
      %c0_38 = arith.constant 0 : index
      %c0_39 = arith.constant 0 : index
      %53 = vector.load %arg11[%c0_38, %c0_39] : memref<32x256xf32, #tpu.memory_space<vmem>>, vector<32x256xf32>
      tpu.vector_store %arg11[%c0_38, %c0_39], %52 {strides = array<i32>} : memref<32x256xf32, #tpu.memory_space<vmem>>, vector<32x256xf32>,
      %cst_40 = arith.constant 0.000000e+00 : f32
      %54 = vector.broadcast %cst_40 : f32 to vector<32x256xf32>
      %c0_41 = arith.constant 0 : index
      %c0_42 = arith.constant 0 : index
      %55 = vector.load %arg12[%c0_41, %c0_42] : memref<32x256xf32, #tpu.memory_space<vmem>>, vector<32x256xf32>
      tpu.vector_store %arg12[%c0_41, %c0_42], %54 {strides = array<i32>} : memref<32x256xf32, #tpu.memory_space<vmem>>, vector<32x256xf32>,
    } else {
    }
    %c0 = arith.constant 0 : index
    %c0_1 = arith.constant 0 : index
    %c0_2 = arith.constant 0 : index
    %c0_3 = arith.constant 0 : index
    %3 = vector.load %arg3[%c0, %c0_1, %c0_2, %c0_3] : memref<1x1x32x256xbf16, #tpu.memory_space<vmem>>, vector<1x1x32x256xbf16>
    %4 = vector.shape_cast %3 : vector<1x1x32x256xbf16> to vector<32x256xbf16>
    %5 = arith.extf %4 : vector<32x256xbf16> to vector<32x256xf32>
    %c0_4 = arith.constant 0 : index
    %c0_5 = arith.constant 0 : index
    %6 = vector.load %arg11[%c0_4, %c0_5] : memref<32x256xf32, #tpu.memory_space<vmem>>, vector<32x256xf32>
    %7 = arith.subf %5, %6 : vector<32x256xf32>
    %cst = arith.constant 5.000000e-01 : f32
    %8 = vector.broadcast %cst : f32 to vector<32x256xf32>
    %9 = arith.mulf %7, %8 : vector<32x256xf32>
    %10 = arith.addf %6, %9 : vector<32x256xf32>
    %cst_6 = arith.constant 1.000000e+00 : f32
    %11 = vector.broadcast %cst_6 : f32 to vector<32x256xf32>
    %12 = arith.cmpf oge, %10, %11 : vector<32x256xf32>
    %cst_7 = arith.constant 0.000000e+00 : f32
    %13 = vector.broadcast %cst_7 : f32 to vector<32x256xf32>
    %14 = arith.select %12, %13, %10 : vector<32x256xi1>, vector<32x256xf32>
    %c0_8 = arith.constant 0 : index
    %c0_9 = arith.constant 0 : index
    %15 = vector.load %arg11[%c0_8, %c0_9] : memref<32x256xf32, #tpu.memory_space<vmem>>, vector<32x256xf32>
    tpu.vector_store %arg11[%c0_8, %c0_9], %14 {strides = array<i32>} : memref<32x256xf32, #tpu.memory_space<vmem>>, vector<32x256xf32>,
    %c0_10 = arith.constant 0 : index
    %c0_11 = arith.constant 0 : index
    %16 = vector.load %arg5[%c0_10, %c0_11] : memref<32x32xbf16, #tpu.memory_space<vmem>>, vector<32x32xbf16>
    %17 = arith.extui %12 : vector<32x256xi1> to vector<32x256xi32>
    %18 = arith.sitofp %17 : vector<32x256xi32> to vector<32x256xf32>
    %19 = arith.truncf %18 : vector<32x256xf32> to vector<32x256xbf16>
    %cst_12 = arith.constant dense<0.000000e+00> : vector<32x256xf32>
    %20 = tpu.matmul %16, %19, %cst_12 {dimension_numbers = #tpu.dot_dimension_numbers<[1], [0], [0], [1], [0, 0, 1, 1], [], []>} : vector<32x32xbf16>, vector<32x256xbf16>, vector<32x256xf32> -> vector<32x256xf32>
    %c0_13 = arith.constant 0 : index
    %c0_14 = arith.constant 0 : index
    %21 = vector.load %arg6[%c0_13, %c0_14] : memref<32x1xf32, #tpu.memory_space<vmem>>, vector<32x1xf32>
    %22 = vector.broadcast %21 : vector<32x1xf32> to vector<32x256xf32>
    %23 = arith.addf %20, %22 : vector<32x256xf32>
    %24 = arith.addf %23, %5 : vector<32x256xf32>
    %c0_15 = arith.constant 0 : index
    %c0_16 = arith.constant 0 : index
    %25 = vector.load %arg12[%c0_15, %c0_16] : memref<32x256xf32, #tpu.memory_space<vmem>>, vector<32x256xf32>
    %26 = arith.subf %24, %25 : vector<32x256xf32>
    %cst_17 = arith.constant 5.000000e-01 : f32
    %27 = vector.broadcast %cst_17 : f32 to vector<32x256xf32>
    %28 = arith.mulf %26, %27 : vector<32x256xf32>
    %29 = arith.addf %25, %28 : vector<32x256xf32>
    %cst_18 = arith.constant 1.000000e+00 : f32
    %30 = vector.broadcast %cst_18 : f32 to vector<32x256xf32>
    %31 = arith.cmpf oge, %29, %30 : vector<32x256xf32>
    %cst_19 = arith.constant 0.000000e+00 : f32
    %32 = vector.broadcast %cst_19 : f32 to vector<32x256xf32>
    %33 = arith.select %31, %32, %29 : vector<32x256xi1>, vector<32x256xf32>
    %c0_20 = arith.constant 0 : index
    %c0_21 = arith.constant 0 : index
    %34 = vector.load %arg12[%c0_20, %c0_21] : memref<32x256xf32, #tpu.memory_space<vmem>>, vector<32x256xf32>
    tpu.vector_store %arg12[%c0_20, %c0_21], %33 {strides = array<i32>} : memref<32x256xf32, #tpu.memory_space<vmem>>, vector<32x256xf32>,
    %c0_22 = arith.constant 0 : index
    %c0_23 = arith.constant 0 : index
    %35 = vector.load %arg7[%c0_22, %c0_23] : memref<32x32xbf16, #tpu.memory_space<vmem>>, vector<32x32xbf16>
    %36 = arith.extui %31 : vector<32x256xi1> to vector<32x256xi32>
    %37 = arith.sitofp %36 : vector<32x256xi32> to vector<32x256xf32>
    %38 = arith.truncf %37 : vector<32x256xf32> to vector<32x256xbf16>
    %cst_24 = arith.constant dense<0.000000e+00> : vector<32x256xf32>
    %39 = tpu.matmul %35, %38, %cst_24 {dimension_numbers = #tpu.dot_dimension_numbers<[1], [0], [0], [1], [0, 0, 1, 1], [], []>} : vector<32x32xbf16>, vector<32x256xbf16>, vector<32x256xf32> -> vector<32x256xf32>
    %c0_25 = arith.constant 0 : index
    %c0_26 = arith.constant 0 : index
    %40 = vector.load %arg8[%c0_25, %c0_26] : memref<32x1xf32, #tpu.memory_space<vmem>>, vector<32x1xf32>
    %41 = vector.broadcast %40 : vector<32x1xf32> to vector<32x256xf32>
    %42 = arith.addf %39, %41 : vector<32x256xf32>
    %c0_27 = arith.constant 0 : index
    %c0_28 = arith.constant 0 : index
    %c0_29 = arith.constant 0 : index
    %c0_30 = arith.constant 0 : index
    %43 = vector.load %arg4[%c0_27, %c0_28, %c0_29, %c0_30] : memref<1x1x32x256xbf16, #tpu.memory_space<vmem>>, vector<1x1x32x256xbf16>
    %44 = vector.shape_cast %43 : vector<1x1x32x256xbf16> to vector<32x256xbf16>
    %45 = arith.extf %44 : vector<32x256xbf16> to vector<32x256xf32>
    %46 = arith.mulf %42, %45 : vector<32x256xf32>
    %c0_31 = arith.constant 0 : index
    %c0_32 = arith.constant 0 : index
    %47 = vector.load %arg9[%c0_31, %c0_32] : memref<32x1xf32, #tpu.memory_space<vmem>>, vector<32x1xf32>
    %48 = vector.broadcast %47 : vector<32x1xf32> to vector<32x256xf32>
    %49 = arith.addf %46, %48 : vector<32x256xf32>
    %50 = vector.shape_cast %49 : vector<32x256xf32> to vector<1x1x32x256xf32>
    %c0_33 = arith.constant 0 : index
    %c0_34 = arith.constant 0 : index
    %c0_35 = arith.constant 0 : index
    %c0_36 = arith.constant 0 : index
    %51 = vector.load %arg10[%c0_33, %c0_34, %c0_35, %c0_36] : memref<1x1x32x256xf32, #tpu.memory_space<vmem>>, vector<1x1x32x256xf32>
    tpu.vector_store %arg10[%c0_33, %c0_34, %c0_35, %c0_36], %50 {strides = array<i32>} : memref<1x1x32x256xf32, #tpu.memory_space<vmem>>, vector<1x1x32x256xf32>,
    return
  }
  func.func @transform_0(%arg0: i32, %arg1: i32, %arg2: i32) -> (i32, i32, i32, i32) {
    %c0_i32 = arith.constant 0 : i32
    %c0_i32_0 = arith.constant 0 : i32
    return %arg2, %arg0, %c0_i32, %arg1 : i32, i32, i32, i32
  }
  func.func @transform_1(%arg0: i32, %arg1: i32, %arg2: i32) -> (i32, i32, i32, i32) {
    %c0_i32 = arith.constant 0 : i32
    %c0_i32_0 = arith.constant 0 : i32
    return %arg2, %arg0, %c0_i32, %arg1 : i32, i32, i32, i32
  }
  func.func @transform_2(%arg0: i32, %arg1: i32, %arg2: i32) -> (i32, i32) {
    %c0_i32 = arith.constant 0 : i32
    %c0_i32_0 = arith.constant 0 : i32
    %c0_i32_1 = arith.constant 0 : i32
    return %c0_i32, %c0_i32_0 : i32, i32
  }
  func.func @transform_3(%arg0: i32, %arg1: i32, %arg2: i32) -> (i32, i32) {
    %c0_i32 = arith.constant 0 : i32
    %c0_i32_0 = arith.constant 0 : i32
    %c0_i32_1 = arith.constant 0 : i32
    return %c0_i32, %c0_i32_0 : i32, i32
  }
  func.func @transform_4(%arg0: i32, %arg1: i32, %arg2: i32) -> (i32, i32) {
    %c0_i32 = arith.constant 0 : i32
    %c0_i32_0 = arith.constant 0 : i32
    %c0_i32_1 = arith.constant 0 : i32
    return %c0_i32, %c0_i32_0 : i32, i32
  }
  func.func @transform_5(%arg0: i32, %arg1: i32, %arg2: i32) -> (i32, i32) {
    %c0_i32 = arith.constant 0 : i32
    %c0_i32_0 = arith.constant 0 : i32
    %c0_i32_1 = arith.constant 0 : i32
    return %c0_i32, %c0_i32_0 : i32, i32
  }
  func.func @transform_6(%arg0: i32, %arg1: i32, %arg2: i32) -> (i32, i32) {
    %c0_i32 = arith.constant 0 : i32
    %c0_i32_0 = arith.constant 0 : i32
    %c0_i32_1 = arith.constant 0 : i32
    return %c0_i32, %c0_i32_0 : i32, i32
  }
  func.func @transform_7(%arg0: i32, %arg1: i32, %arg2: i32) -> (i32, i32, i32, i32) {
    %c0_i32 = arith.constant 0 : i32
    %c0_i32_0 = arith.constant 0 : i32
    return %arg2, %arg0, %c0_i32, %arg1 : i32, i32, i32, i32
  }
}

</mosaic_0001>

<llo_original>
// kernel: tpu_custom_call.1
$region0: #{tpu_custom_call.1}
  #allocation0 [shape = 'u32[]', space=smem, size = 0x4, offset = 0x4, fixed_abs, tag = 'smem constant byte address 0x4 - core index']
  #allocation1 [shape = 'u32[72,128]{1,0:T(1,128)}', space=vmem, size = 0x9000, scoped, tag = 'internal scratch']
  #allocation2 [shape = 'f32[32,256]{1,0:T(8,128)}', space=vmem, size = 0x8000, scoped, tag = 'scratch operand']
  #allocation3 [shape = 'f32[32,256]{1,0:T(8,128)}', space=vmem, size = 0x8000, scoped, tag = 'scratch operand']
  %s0 = inlined_call_operand.hbm [shape: bf16[2,2,32,256], index: 0, kind: input, shape index: {}]
  %s1 = inlined_call_operand.hbm [shape: bf16[2,2,32,256], index: 1, kind: input, shape index: {}]
  %s2 = inlined_call_operand.vmem [shape: bf16[32,32], index: 2, kind: input, shape index: {}]
  %s3 = inlined_call_operand.vmem [shape: f32[32,1], index: 3, kind: input, shape index: {}]
  %s4 = inlined_call_operand.vmem [shape: bf16[32,32], index: 4, kind: input, shape index: {}]
  %s5 = inlined_call_operand.vmem [shape: f32[32,1], index: 5, kind: input, shape index: {}]
  %s6 = inlined_call_operand.vmem [shape: f32[32,1], index: 6, kind: input, shape index: {}]
  %s7 = inlined_call_operand.hbm [shape: f32[2,2,32,256], index: 7, kind: output, shape index: {}]
  %s8 = sld [smem:[#allocation0]]
  $region73: #{tpu_custom_call.1} parent=0
    _
  %s10 = ssub.s32 1, %s8
  %s11 = scalar_select 0, %s10, %s8
  $region1: #{tpu_custom_call.1} parent=0
    #allocation4 [shape = 'u8[32768]{0}', space=vmem, size = 0x8000, scoped, tag = 'input window, operand 0']
    #allocation5 [shape = 's32[2]{0}', space=sflag, size = 0x8, scoped, tag = 'scoped memory for tpu_custom_call.1']
    #allocation6 [shape = 's32[2]{0}', space=sflag, size = 0x8, scoped, tag = 'scoped memory for tpu_custom_call.1']
    #allocation7 [shape = 'u8[32768]{0}', space=vmem, size = 0x8000, scoped, tag = 'input window, operand 1']
    #allocation8 [shape = 's32[2]{0}', space=sflag, size = 0x8, scoped, tag = 'scoped memory for tpu_custom_call.1']
    #allocation9 [shape = 'u8[65536]{0}', space=vmem, size = 0x10000, scoped, tag = 'output window, operand 0']
    %12 = vsyncpa [#allocation5], 0
    %s13 = scalar_lea.sflag [#allocation5], 1
    %14 = vsyncpa %s13, 0
    %15 = vsyncpa [#allocation8], 0
    %s16 = scalar_lea.sflag [#allocation8], 1
    %17 = vsyncpa %s16, 0
    %18 = vsyncpa [#allocation6], 0
    %s19 = scalar_lea.sflag [#allocation6], 1
    %20 = vsyncpa %s19, 0
    loop: start=0, step=1, limit=6
    $region2: #{tpu_custom_call.1} parent=1 // loop_pre_header
      _
    $region3: #{tpu_custom_call.1} parent=1 // loop_header
      %s22 = sphi 0, %s26
      %p23 = scmp.ge.s32.totalorder %s22, 6
      %s29 = sphi 0, %s48
      %s30 = sphi 0, %s44
      %s31 = sphi 0, %s40
      %s32 = sphi 0, %s29
      %s33 = sphi 0, %s30
      %s34 = sphi 0, %s31
      %s35 = sphi 0, %s32
      %s36 = sphi 0, %s33
      %s37 = sphi 0, %s34
      %s55 = sphi 0, %s57
      %s58 = sphi 0, %s55
      %s59 = sphi 0, %s58
      %s75 = sphi 0, %s59
      %s85 = sphi 0, %s87
      %s88 = sphi 0, %s85
      %s89 = sphi 0, %s88
      %s105 = sphi 0, %s89
      %s109 = sphi 0, %s109
      %s111 = sphi 0, %s109
      %s112 = sphi 0, %s111
      %s126 = sphi 0, %s112
      %s130 = sphi 0, %s130
      %s132 = sphi 0, %s130
      %s133 = sphi 0, %s132
      %s147 = sphi 0, %s133
      %s151 = sphi 0, %s151
      %s153 = sphi 0, %s151
      %s154 = sphi 0, %s153
      %s168 = sphi 0, %s154
      %s172 = sphi 0, %s172
      %s174 = sphi 0, %s172
      %s175 = sphi 0, %s174
      %s189 = sphi 0, %s175
      %s193 = sphi 0, %s193
      %s195 = sphi 0, %s193
      %s196 = sphi 0, %s195
      %s210 = sphi 0, %s196
      %s220 = sphi 0, %s222
      %s223 = sphi 0, %s220
      %s224 = sphi 0, %s223
      %s240 = sphi 0, %s224
    $region4: #{tpu_custom_call.1} parent=1 // loop_header_branch
      %25 = sbr.rel (%p23) target = $region8
    $region5: #{tpu_custom_call.1} parent=1 // loop_body
      %s27 = ssub.s32 %s22, 1
      %s28 = ssub.s32 %s22, 2
      %s38 = sadd.s32 1, %s31
      %p39 = scmp.ge.s32.totalorder %s38, 2
      %s40 = scalar_select %p39, 0, %s38
      %s41 = sadd.s32 1, %s30
      %s42 = scalar_select %p39, %s41, %s30
      %p43 = scmp.ge.s32.totalorder %s42, 1
      %s44 = scalar_select %p43, 0, %s42
      %s45 = sadd.s32 1, %s29
      %s46 = scalar_select %p43, %s45, %s29
      %p47 = scmp.ge.s32.totalorder %s46, 2
      %s48 = scalar_select %p47, 0, %s46
      %s49 = ssub.s32 %s31, %s40
      %s50 = ssub.s32 %s29, %s48
      %s51 = sor.u32 %s49, %s50
      %s52 = ssub.s32 %s30, %s44
      %s53 = sor.u32 %s51, %s52
      %p54 = scmp.eq.s32.totalorder %s53, 0
      %s56 = sadd.s32 %s55, 1
      %s57 = scalar_select %p54, %s55, %s56
      %p60 = pneg %p54
      %p61 = scmp.eq.s32.totalorder %s22, 3
      %p62 = por %p60, %p61
      %p63 = scmp.ne.s32.totalorder %s55, %s58
      %p64 = scmp.eq.s32.totalorder %s22, 0
      %p65 = por %p63, %p64
      %p66 = scmp.ne.s32.totalorder %s55, %s58
      %p67 = scmp.eq.s32.totalorder %s27, 3
      %p68 = por %p66, %p67
      %p69 = scmp.ne.s32.totalorder %s58, %s59
      %p70 = scmp.eq.s32.totalorder %s27, 0
      %p71 = por %p69, %p70
      %p72 = scmp.ne.s32.totalorder %s58, %s59
      %p73 = scmp.eq.s32.totalorder %s28, 3
      %p74 = por %p72, %p73
      %p76 = scmp.ne.s32.totalorder %s59, %s75
      %p77 = scmp.eq.s32.totalorder %s28, 0
      %p78 = por %p76, %p77
      %s79 = ssub.s32 %s31, %s40
      %s80 = ssub.s32 %s29, %s48
      %s81 = sor.u32 %s79, %s80
      %s82 = ssub.s32 %s30, %s44
      %s83 = sor.u32 %s81, %s82
      %p84 = scmp.eq.s32.totalorder %s83, 0
      %s86 = sadd.s32 %s85, 1
      %s87 = scalar_select %p84, %s85, %s86
      %p90 = pneg %p84
      %p91 = scmp.eq.s32.totalorder %s22, 3
      %p92 = por %p90, %p91
      %p93 = scmp.ne.s32.totalorder %s85, %s88
      %p94 = scmp.eq.s32.totalorder %s22, 0
      %p95 = por %p93, %p94
      %p96 = scmp.ne.s32.totalorder %s85, %s88
      %p97 = scmp.eq.s32.totalorder %s27, 3
      %p98 = por %p96, %p97
      %p99 = scmp.ne.s32.totalorder %s88, %s89
      %p100 = scmp.eq.s32.totalorder %s27, 0
      %p101 = por %p99, %p100
      %p102 = scmp.ne.s32.totalorder %s88, %s89
      %p103 = scmp.eq.s32.totalorder %s28, 3
      %p104 = por %p102, %p103
      %p106 = scmp.ne.s32.totalorder %s89, %s105
      %p107 = scmp.eq.s32.totalorder %s28, 0
      %p108 = por %p106, %p107
      %s110 = sadd.s32 %s109, 1
      %p113 = scmp.eq.s32.totalorder %s22, 3
      %p114 = scmp.ne.s32.totalorder %s109, %s111
      %p115 = scmp.eq.s32.totalorder %s22, 0
      %p116 = por %p114, %p115
      %p117 = scmp.ne.s32.totalorder %s109, %s111
      %p118 = scmp.eq.s32.totalorder %s27, 3
      %p119 = por %p117, %p118
      %p120 = scmp.ne.s32.totalorder %s111, %s112
      %p121 = scmp.eq.s32.totalorder %s27, 0
      %p122 = por %p120, %p121
      %p123 = scmp.ne.s32.totalorder %s111, %s112
      %p124 = scmp.eq.s32.totalorder %s28, 3
      %p125 = por %p123, %p124
      %p127 = scmp.ne.s32.totalorder %s112, %s126
      %p128 = scmp.eq.s32.totalorder %s28, 0
      %p129 = por %p127, %p128
      %s131 = sadd.s32 %s130, 1
      %p134 = scmp.eq.s32.totalorder %s22, 3
      %p135 = scmp.ne.s32.totalorder %s130, %s132
      %p136 = scmp.eq.s32.totalorder %s22, 0
      %p137 = por %p135, %p136
      %p138 = scmp.ne.s32.totalorder %s130, %s132
      %p139 = scmp.eq.s32.totalorder %s27, 3
      %p140 = por %p138, %p139
      %p141 = scmp.ne.s32.totalorder %s132, %s133
      %p142 = scmp.eq.s32.totalorder %s27, 0
      %p143 = por %p141, %p142
      %p144 = scmp.ne.s32.totalorder %s132, %s133
      %p145 = scmp.eq.s32.totalorder %s28, 3
      %p146 = por %p144, %p145
      %p148 = scmp.ne.s32.totalorder %s133, %s147
      %p149 = scmp.eq.s32.totalorder %s28, 0
      %p150 = por %p148, %p149
      %s152 = sadd.s32 %s151, 1
      %p155 = scmp.eq.s32.totalorder %s22, 3
      %p156 = scmp.ne.s32.totalorder %s151, %s153
      %p157 = scmp.eq.s32.totalorder %s22, 0
      %p158 = por %p156, %p157
      %p159 = scmp.ne.s32.totalorder %s151, %s153
      %p160 = scmp.eq.s32.totalorder %s27, 3
      %p161 = por %p159, %p160
      %p162 = scmp.ne.s32.totalorder %s153, %s154
      %p163 = scmp.eq.s32.totalorder %s27, 0
      %p164 = por %p162, %p163
      %p165 = scmp.ne.s32.totalorder %s153, %s154
      %p166 = scmp.eq.s32.totalorder %s28, 3
      %p167 = por %p165, %p166
      %p169 = scmp.ne.s32.totalorder %s154, %s168
      %p170 = scmp.eq.s32.totalorder %s28, 0
      %p171 = por %p169, %p170
      %s173 = sadd.s32 %s172, 1
      %p176 = scmp.eq.s32.totalorder %s22, 3
      %p177 = scmp.ne.s32.totalorder %s172, %s174
      %p178 = scmp.eq.s32.totalorder %s22, 0
      %p179 = por %p177, %p178
      %p180 = scmp.ne.s32.totalorder %s172, %s174
      %p181 = scmp.eq.s32.totalorder %s27, 3
      %p182 = por %p180, %p181
      %p183 = scmp.ne.s32.totalorder %s174, %s175
      %p184 = scmp.eq.s32.totalorder %s27, 0
      %p185 = por %p183, %p184
      %p186 = scmp.ne.s32.totalorder %s174, %s175
      %p187 = scmp.eq.s32.totalorder %s28, 3
      %p188 = por %p186, %p187
      %p190 = scmp.ne.s32.totalorder %s175, %s189
      %p191 = scmp.eq.s32.totalorder %s28, 0
      %p192 = por %p190, %p191
      %s194 = sadd.s32 %s193, 1
      %p197 = scmp.eq.s32.totalorder %s22, 3
      %p198 = scmp.ne.s32.totalorder %s193, %s195
      %p199 = scmp.eq.s32.totalorder %s22, 0
      %p200 = por %p198, %p199
      %p201 = scmp.ne.s32.totalorder %s193, %s195
      %p202 = scmp.eq.s32.totalorder %s27, 3
      %p203 = por %p201, %p202
      %p204 = scmp.ne.s32.totalorder %s195, %s196
      %p205 = scmp.eq.s32.totalorder %s27, 0
      %p206 = por %p204, %p205
      %p207 = scmp.ne.s32.totalorder %s195, %s196
      %p208 = scmp.eq.s32.totalorder %s28, 3
      %p209 = por %p207, %p208
      %p211 = scmp.ne.s32.totalorder %s196, %s210
      %p212 = scmp.eq.s32.totalorder %s28, 0
      %p213 = por %p211, %p212
      %s214 = ssub.s32 %s31, %s40
      %s215 = ssub.s32 %s29, %s48
      %s216 = sor.u32 %s214, %s215
      %s217 = ssub.s32 %s30, %s44
      %s218 = sor.u32 %s216, %s217
      %p219 = scmp.eq.s32.totalorder %s218, 0
      %s221 = sadd.s32 %s220, 1
      %s222 = scalar_select %p219, %s220, %s221
      %p225 = pneg %p219
      %p226 = scmp.eq.s32.totalorder %s22, 3
      %p227 = por %p225, %p226
      %p228 = scmp.ne.s32.totalorder %s220, %s223
      %p229 = scmp.eq.s32.totalorder %s22, 0
      %p230 = por %p228, %p229
      %p231 = scmp.ne.s32.totalorder %s220, %s223
      %p232 = scmp.eq.s32.totalorder %s27, 3
      %p233 = por %p231, %p232
      %p234 = scmp.ne.s32.totalorder %s223, %s224
      %p235 = scmp.eq.s32.totalorder %s27, 0
      %p236 = por %p234, %p235
      %p237 = scmp.ne.s32.totalorder %s223, %s224
      %p238 = scmp.eq.s32.totalorder %s28, 3
      %p239 = por %p237, %p238
      %p241 = scmp.ne.s32.totalorder %s224, %s240
      %p242 = scmp.eq.s32.totalorder %s28, 0
      %p243 = por %p241, %p242
      %p244 = scmp.le.s32.totalorder 1, %s22
      %p245 = scmp.lt.s32.totalorder %s22, 5
      %p246 = pnand %p244, %p245
      %p247 = pneg %p246
      // Predicated region
      $region9: #{tpu_custom_call.1} parent=5 // pred_check
        _
      $region10: #{tpu_custom_call.1} parent=5 // pred_check_branch
        %249 = sbr.rel (%p246) target = $region12
      $region11: #{tpu_custom_call.1} parent=5 // pred_region
        %s250 = ssub.s32 %s22, 1
        // Predicated region
        $region13: #{tpu_custom_call.1} parent=11 // pred_check
          %p251 = pneg %p122
        $region14: #{tpu_custom_call.1} parent=11 // pred_check_branch
          %253 = sbr.rel (%p251) target = $region16
        $region15: #{tpu_custom_call.1} parent=11 // pred_region
          _
        $region16: #{tpu_custom_call.1} parent=11 // pred_fallthru
          _
        // Predicated region
        $region17: #{tpu_custom_call.1} parent=11 // pred_check
          %p254 = pneg %p143
        $region18: #{tpu_custom_call.1} parent=11 // pred_check_branch
          %256 = sbr.rel (%p254) target = $region20
        $region19: #{tpu_custom_call.1} parent=11 // pred_region
          _
        $region20: #{tpu_custom_call.1} parent=11 // pred_fallthru
          _
        // Predicated region
        $region21: #{tpu_custom_call.1} parent=11 // pred_check
          %p257 = pneg %p164
        $region22: #{tpu_custom_call.1} parent=11 // pred_check_branch
          %259 = sbr.rel (%p257) target = $region24
        $region23: #{tpu_custom_call.1} parent=11 // pred_region
          _
        $region24: #{tpu_custom_call.1} parent=11 // pred_fallthru
          _
        // Predicated region
        $region25: #{tpu_custom_call.1} parent=11 // pred_check
          %p260 = pneg %p185
        $region26: #{tpu_custom_call.1} parent=11 // pred_check_branch
          %262 = sbr.rel (%p260) target = $region28
        $region27: #{tpu_custom_call.1} parent=11 // pred_region
          _
        $region28: #{tpu_custom_call.1} parent=11 // pred_fallthru
          _
        // Predicated region
        $region29: #{tpu_custom_call.1} parent=11 // pred_check
          %p263 = pneg %p206
        $region30: #{tpu_custom_call.1} parent=11 // pred_check_branch
          %265 = sbr.rel (%p263) target = $region32
        $region31: #{tpu_custom_call.1} parent=11 // pred_region
          _
        $region32: #{tpu_custom_call.1} parent=11 // pred_fallthru
          _
      $region12: #{tpu_custom_call.1} parent=5 // pred_fallthru
        _
      %p266 = scmp.lt.s32.totalorder %s22, 4
      // Predicated region
      $region33: #{tpu_custom_call.1} parent=5 // pred_check
        %p267 = pneg %p266
      $region34: #{tpu_custom_call.1} parent=5 // pred_check_branch
        %269 = sbr.rel (%p267) target = $region36
      $region35: #{tpu_custom_call.1} parent=5 // pred_region
        // Predicated region
        $region37: #{tpu_custom_call.1} parent=35 // pred_check
          %p270 = pneg %p65
        $region38: #{tpu_custom_call.1} parent=35 // pred_check_branch
          %272 = sbr.rel (%p270) target = $region40
        $region39: #{tpu_custom_call.1} parent=35 // pred_region
          %s273 = sand.u32 %s55, 1
          %s274 = scalar_lea.sflag [#allocation5], %s273
          %s275 = sand.u32 %s55, 1
          %s276 = smul.addr %s275, 32
          %s277 = scalar_lea.vmem [#allocation4], %s276
          %s278 = smul.u32 2, %s30
          %280 = vsyncadd %s274, 0
          %s281 = smul.addr %s29, 8
          %s282 = sadd.s32 %s278, %s281
          %s283 = smul.addr %s31, 16
          %s284 = sadd.s32 %s282, %s283
          %s285 = smul.addr %s284, 4
          %s286 = scalar_lea.hbm %s0, %s285
          %s287 = sshll.u32 %s286, 4
          %s288 = int_to_ptr.hbm [resolvable:$true] %s287
          %s289 = sshll.u32 %s277, 4
          %s290 = int_to_ptr.vmem [resolvable:$true] %s289
          %295 = dma.hbm_to_vmem [thread:$0]  %s288, 512, %s290, %s274, 128, 128, 8
        $region40: #{tpu_custom_call.1} parent=35 // pred_fallthru
          _
        // Predicated region
        $region41: #{tpu_custom_call.1} parent=35 // pred_check
          %p296 = pneg %p95
        $region42: #{tpu_custom_call.1} parent=35 // pred_check_branch
          %298 = sbr.rel (%p296) target = $region44
        $region43: #{tpu_custom_call.1} parent=35 // pred_region
          %s299 = sand.u32 %s85, 1
          %s300 = scalar_lea.sflag [#allocation8], %s299
          %s301 = sand.u32 %s85, 1
          %s302 = smul.addr %s301, 32
          %s303 = scalar_lea.vmem [#allocation7], %s302
          %s304 = smul.u32 2, %s30
          %306 = vsyncadd %s300, 0
          %s307 = smul.addr %s29, 8
          %s308 = sadd.s32 %s304, %s307
          %s309 = smul.addr %s31, 16
          %s310 = sadd.s32 %s308, %s309
          %s311 = smul.addr %s310, 4
          %s312 = scalar_lea.hbm %s1, %s311
          %s313 = sshll.u32 %s312, 4
          %s314 = int_to_ptr.hbm [resolvable:$true] %s313
          %s315 = sshll.u32 %s303, 4
          %s316 = int_to_ptr.vmem [resolvable:$true] %s315
          %321 = dma.hbm_to_vmem [thread:$0]  %s314, 512, %s316, %s300, 128, 128, 8
        $region44: #{tpu_custom_call.1} parent=35 // pred_fallthru
          _
      $region36: #{tpu_custom_call.1} parent=5 // pred_fallthru
        _
      %p322 = scmp.le.s32.totalorder 1, %s22
      %p323 = scmp.lt.s32.totalorder %s22, 5
      %p324 = pnand %p322, %p323
      %p325 = pneg %p324
      // Predicated region
      $region45: #{tpu_custom_call.1} parent=5 // pred_check
        _
      $region46: #{tpu_custom_call.1} parent=5 // pred_check_branch
        %327 = sbr.rel (%p324) target = $region48
      $region47: #{tpu_custom_call.1} parent=5 // pred_region
        %s328 = ssub.s32 %s22, 1
        %s329 = sand.u32 %s58, 1
        %s330 = scalar_lea.sflag [#allocation5], %s329
        %s331 = sand.u32 %s58, 1
        %s332 = smul.addr %s331, 32
        %s333 = scalar_lea.vmem [#allocation4], %s332
        // Predicated region
        $region49: #{tpu_custom_call.1} parent=47 // pred_check
          %p334 = pneg %p71
        $region50: #{tpu_custom_call.1} parent=47 // pred_check_branch
          %336 = sbr.rel (%p334) target = $region52
        $region51: #{tpu_custom_call.1} parent=47 // pred_region
          %338 = dma.done %s330, 512
        $region52: #{tpu_custom_call.1} parent=47 // pred_fallthru
          _
        %s339 = sand.u32 %s88, 1
        %s340 = scalar_lea.sflag [#allocation8], %s339
        %s341 = sand.u32 %s88, 1
        %s342 = smul.addr %s341, 32
        %s343 = scalar_lea.vmem [#allocation7], %s342
        // Predicated region
        $region53: #{tpu_custom_call.1} parent=47 // pred_check
          %p344 = pneg %p101
        $region54: #{tpu_custom_call.1} parent=47 // pred_check_branch
          %346 = sbr.rel (%p344) target = $region56
        $region55: #{tpu_custom_call.1} parent=47 // pred_region
          %348 = dma.done %s340, 512
        $region56: #{tpu_custom_call.1} parent=47 // pred_fallthru
          _
        %s349 = sand.u32 %s58, 1
        %s350 = scalar_lea.sflag [#allocation5], %s349
        %s351 = sand.u32 %s58, 1
        %s352 = smul.addr %s351, 32
        %s353 = scalar_lea.vmem [#allocation4], %s352
        %p354 = pneg %p71
        %p355 = pneg %p68
        %s356 = sand.u32 %s88, 1
        %s357 = scalar_lea.sflag [#allocation8], %s356
        %s358 = sand.u32 %s88, 1
        %s359 = smul.addr %s358, 32
        %s360 = scalar_lea.vmem [#allocation7], %s359
        %p361 = pneg %p101
        %p362 = pneg %p98
        %p363 = pneg %p122
        %p364 = pneg %p119
        %p365 = pneg %p143
        %p366 = pneg %p140
        %p367 = pneg %p164
        %p368 = pneg %p161
        %p369 = pneg %p185
        %p370 = pneg %p182
        %p371 = pneg %p206
        %p372 = pneg %p203
        %p373 = pneg %p236
        %p374 = pneg %p233
        %s375 = sand.u32 %s223, 1
        %s376 = scalar_lea.sflag [#allocation6], %s375
        %s377 = sand.u32 %s223, 1
        %s378 = smul.addr %s377, 64
        %s379 = scalar_lea.vmem [#allocation9], %s378
        %s380 = smul.u32 2, %s33
        %s381 = smul.u32 2, %s33
        %s382 = smul.u32 2, %s33
        %p384 = scmp.eq.s32.totalorder %s34, 0
        // Predicated region
        $region57: #{tpu_custom_call.1} parent=47 // pred_check
          %p385 = pneg %p384
        $region58: #{tpu_custom_call.1} parent=47 // pred_check_branch
          %387 = sbr.rel (%p385) target = $region60
        $region59: #{tpu_custom_call.1} parent=47 // pred_region
          %388 = vst [vmem:[#allocation2] sm:$0xff] 0.0
          %389 = vst [vmem:[#allocation2 + $0x8] sm:$0xff] 0.0
          %390 = vst [vmem:[#allocation2 + $0x10] sm:$0xff] 0.0
          %391 = vst [vmem:[#allocation2 + $0x18] sm:$0xff] 0.0
          %392 = vst [vmem:[#allocation2 + $0x20] sm:$0xff] 0.0
          %393 = vst [vmem:[#allocation2 + $0x28] sm:$0xff] 0.0
          %394 = vst [vmem:[#allocation2 + $0x30] sm:$0xff] 0.0
          %395 = vst [vmem:[#allocation2 + $0x38] sm:$0xff] 0.0
          %396 = vst [vmem:[#allocation3] sm:$0xff] 0.0
          %397 = vst [vmem:[#allocation3 + $0x8] sm:$0xff] 0.0
          %398 = vst [vmem:[#allocation3 + $0x10] sm:$0xff] 0.0
          %399 = vst [vmem:[#allocation3 + $0x18] sm:$0xff] 0.0
          %400 = vst [vmem:[#allocation3 + $0x20] sm:$0xff] 0.0
          %401 = vst [vmem:[#allocation3 + $0x28] sm:$0xff] 0.0
          %402 = vst [vmem:[#allocation3 + $0x30] sm:$0xff] 0.0
          %403 = vst [vmem:[#allocation3 + $0x38] sm:$0xff] 0.0
        $region60: #{tpu_custom_call.1} parent=47 // pred_fallthru
          _
        %v404 = vld [vmem:[%s333] sm:$0xff]
        %v405 = vld [vmem:[%s333 + $0x8] sm:$0xff]
        %v406 = vld [vmem:[%s333 + $0x10] sm:$0xff]
        %v407 = vld [vmem:[%s333 + $0x18] sm:$0xff]
        %v408 = vunpack.c.l.bf16 %v404
        %v409 = vunpack.c.h.bf16 %v404
        %v410 = vunpack.c.l.bf16 %v405
        %v411 = vunpack.c.h.bf16 %v405
        %v412 = vunpack.c.l.bf16 %v406
        %v413 = vunpack.c.h.bf16 %v406
        %v414 = vunpack.c.l.bf16 %v407
        %v415 = vunpack.c.h.bf16 %v407
        %v416 = vld [vmem:[#allocation2] sm:$0xff]
        %v417 = vld [vmem:[#allocation2 + $0x8] sm:$0xff]
        %v418 = vld [vmem:[#allocation2 + $0x10] sm:$0xff]
        %v419 = vld [vmem:[#allocation2 + $0x18] sm:$0xff]
        %v420 = vld [vmem:[#allocation2 + $0x20] sm:$0xff]
        %v421 = vld [vmem:[#allocation2 + $0x28] sm:$0xff]
        %v422 = vld [vmem:[#allocation2 + $0x30] sm:$0xff]
        %v423 = vld [vmem:[#allocation2 + $0x38] sm:$0xff]
        %v424 = vsub.f32 %v408, %v416
        %v425 = vsub.f32 %v409, %v417
        %v426 = vsub.f32 %v410, %v418
        %v427 = vsub.f32 %v411, %v419
        %v428 = vsub.f32 %v412, %v420
        %v429 = vsub.f32 %v413, %v421
        %v430 = vsub.f32 %v414, %v422
        %v431 = vsub.f32 %v415, %v423
        %v432 = vmul.f32 %v424, 0.5
        %v433 = vmul.f32 %v425, 0.5
        %v434 = vmul.f32 %v426, 0.5
        %v435 = vmul.f32 %v427, 0.5
        %v436 = vmul.f32 %v428, 0.5
        %v437 = vmul.f32 %v429, 0.5
        %v438 = vmul.f32 %v430, 0.5
        %v439 = vmul.f32 %v431, 0.5
        %v440 = vadd.f32 %v416, %v432
        %v441 = vadd.f32 %v417, %v433
        %v442 = vadd.f32 %v418, %v434
        %v443 = vadd.f32 %v419, %v435
        %v444 = vadd.f32 %v420, %v436
        %v445 = vadd.f32 %v421, %v437
        %v446 = vadd.f32 %v422, %v438
        %v447 = vadd.f32 %v423, %v439
        %vm448 = vcmp.ge.f32.partialorder %v440, 1.0
        %vm449 = vcmp.ge.f32.partialorder %v441, 1.0
        %vm450 = vcmp.ge.f32.partialorder %v442, 1.0
        %vm451 = vcmp.ge.f32.partialorder %v443, 1.0
        %vm452 = vcmp.ge.f32.partialorder %v444, 1.0
        %vm453 = vcmp.ge.f32.partialorder %v445, 1.0
        %vm454 = vcmp.ge.f32.partialorder %v446, 1.0
        %vm455 = vcmp.ge.f32.partialorder %v447, 1.0
        %v456 = vsel %vm448, 0.0, %v440
        %v457 = vsel %vm449, 0.0, %v441
        %v458 = vsel %vm450, 0.0, %v442
        %v459 = vsel %vm451, 0.0, %v443
        %v460 = vsel %vm452, 0.0, %v444
        %v461 = vsel %vm453, 0.0, %v445
        %v462 = vsel %vm454, 0.0, %v446
        %v463 = vsel %vm455, 0.0, %v447
        %464 = vst [vmem:[#allocation2] sm:$0xff] %v456
        %465 = vst [vmem:[#allocation2 + $0x8] sm:$0xff] %v457
        %466 = vst [vmem:[#allocation2 + $0x10] sm:$0xff] %v458
        %467 = vst [vmem:[#allocation2 + $0x18] sm:$0xff] %v459
        %468 = vst [vmem:[#allocation2 + $0x20] sm:$0xff] %v460
        %469 = vst [vmem:[#allocation2 + $0x28] sm:$0xff] %v461
        %470 = vst [vmem:[#allocation2 + $0x30] sm:$0xff] %v462
        %471 = vst [vmem:[#allocation2 + $0x38] sm:$0xff] %v463
        %v472 = vld [vmem:[%s2] sm:$0xf]
        %v473 = vld [vmem:[%s2 + $0x4] sm:$0xf]
        %v474 = vld [vmem:[%s2 + $0x8] sm:$0xf]
        %v475 = vld [vmem:[%s2 + $0xc] sm:$0xf]
        %v476 = vsel %vm448, 1, 0
        %v477 = vsel %vm449, 1, 0
        %v478 = vsel %vm450, 1, 0
        %v479 = vsel %vm451, 1, 0
        %v480 = vsel %vm452, 1, 0
        %v481 = vsel %vm453, 1, 0
        %v482 = vsel %vm454, 1, 0
        %v483 = vsel %vm455, 1, 0
        %v484 = vcvt.s32.f32 %v476
        %v485 = vcvt.s32.f32 %v477
        %v486 = vcvt.s32.f32 %v478
        %v487 = vcvt.s32.f32 %v479
        %v488 = vcvt.s32.f32 %v480
        %v489 = vcvt.s32.f32 %v481
        %v490 = vcvt.s32.f32 %v482
        %v491 = vcvt.s32.f32 %v483
        %v492 = vpack.c.bf16 %v486, %v484
        %v493 = vpack.c.bf16 %v487, %v485
        %v494 = vpack.c.bf16 %v490, %v488
        %v495 = vpack.c.bf16 %v491, %v489
        %v496 = vld [vmem:[%s3] sm:$0xff]
        %v497 = vld [vmem:[%s3 + $0x8] sm:$0xff]
        %v498 = vld [vmem:[%s3 + $0x10] sm:$0xff]
        %v499 = vld [vmem:[%s3 + $0x18] sm:$0xff]
        %501 = vset.pattern.permute.xlu0 0
        %502 = vperm.xlu0 %501, %v496
        %v503 = vpop.permute.xlu0 %502
        %506 = vset.pattern.permute.xlu0 0
        %507 = vperm.xlu0 %506, %v497
        %v508 = vpop.permute.xlu0 %507
        %511 = vset.pattern.permute.xlu0 0
        %512 = vperm.xlu0 %511, %v498
        %v513 = vpop.permute.xlu0 %512
        %516 = vset.pattern.permute.xlu0 0
        %517 = vperm.xlu0 %516, %v499
        %v518 = vpop.permute.xlu0 %517
        %v524 = vunpack.c.l.b16 %v472
        %v525 = vunpack.c.l.b16 %v473
        %v526 = vunpack.c.l.b16 %v474
        %v527 = vunpack.c.l.b16 %v475
        %v528 = vpack.c.b16 %v525, %v524
        %v529 = vpack.c.b16 %v527, %v526
        %vm530 = vcmask 261120
        %v532 = vsel %vm530, %v528, 0
        %v535 = vsel %vm530, %v529, 0
        %537 = vmatpush.bf16.msra.mxu0 0
        %538 = vmatpush.bf16.msra.mxu0 0
        %539 = vmatpush.bf16.msra.mxu0 0
        %540 = vmatpush.bf16.msra.mxu0 0
        %541 = vmatpush.bf16.msra.mxu0 0
        %542 = vmatpush.bf16.msra.mxu0 0
        %543 = vmatpush.bf16.msra.mxu0 %v494
        %544 = vmatpush.bf16.msra.mxu0 %v492
        %545 = vmatmul.bf16.gmra.mxu0 %v532
        %v546 = vpop.f32.mrf.mxu0
        %v547 = vadd.f32 %v503, %v546
        %v548 = vpop.f32.mrf.mxu0
        %v549 = vadd.f32 %v508, %v548
        %550 = vmatmul.bf16.gmra.mxu0 %v535
        %v551 = vpop.f32.mrf.mxu0
        %v552 = vadd.f32 %v513, %v551
        %v553 = vpop.f32.mrf.mxu0
        %v554 = vadd.f32 %v518, %v553
        %555 = vdwg.mxu0
        %556 = vmatpush.bf16.msra.mxu0 0
        %557 = vmatpush.bf16.msra.mxu0 0
        %558 = vmatpush.bf16.msra.mxu0 0
        %559 = vmatpush.bf16.msra.mxu0 0
        %560 = vmatpush.bf16.msra.mxu0 0
        %561 = vmatpush.bf16.msra.mxu0 0
        %562 = vmatpush.bf16.msra.mxu0 %v495
        %563 = vmatpush.bf16.msra.mxu0 %v493
        %564 = vmatmul.bf16.gmra.mxu0 %v532
        %v565 = vpop.f32.mrf.mxu0
        %v566 = vadd.f32 %v503, %v565
        %v567 = vpop.f32.mrf.mxu0
        %v568 = vadd.f32 %v508, %v567
        %569 = vmatmul.bf16.gmra.mxu0 %v535
        %v570 = vpop.f32.mrf.mxu0
        %v571 = vadd.f32 %v513, %v570
        %v572 = vpop.f32.mrf.mxu0
        %v573 = vadd.f32 %v518, %v572
        %574 = vdwg.mxu0
        %v575 = vadd.f32 %v547, %v408
        %v576 = vadd.f32 %v566, %v409
        %v577 = vadd.f32 %v549, %v410
        %v578 = vadd.f32 %v568, %v411
        %v579 = vadd.f32 %v552, %v412
        %v580 = vadd.f32 %v571, %v413
        %v581 = vadd.f32 %v554, %v414
        %v582 = vadd.f32 %v573, %v415
        %v583 = vld [vmem:[#allocation3] sm:$0xff]
        %v584 = vld [vmem:[#allocation3 + $0x8] sm:$0xff]
        %v585 = vld [vmem:[#allocation3 + $0x10] sm:$0xff]
        %v586 = vld [vmem:[#allocation3 + $0x18] sm:$0xff]
        %v587 = vld [vmem:[#allocation3 + $0x20] sm:$0xff]
        %v588 = vld [vmem:[#allocation3 + $0x28] sm:$0xff]
        %v589 = vld [vmem:[#allocation3 + $0x30] sm:$0xff]
        %v590 = vld [vmem:[#allocation3 + $0x38] sm:$0xff]
        %v591 = vsub.f32 %v575, %v583
        %v592 = vsub.f32 %v576, %v584
        %v593 = vsub.f32 %v577, %v585
        %v594 = vsub.f32 %v578, %v586
        %v595 = vsub.f32 %v579, %v587
        %v596 = vsub.f32 %v580, %v588
        %v597 = vsub.f32 %v581, %v589
        %v598 = vsub.f32 %v582, %v590
        %v599 = vmul.f32 %v591, 0.5
        %v600 = vmul.f32 %v592, 0.5
        %v601 = vmul.f32 %v593, 0.5
        %v602 = vmul.f32 %v594, 0.5
        %v603 = vmul.f32 %v595, 0.5
        %v604 = vmul.f32 %v596, 0.5
        %v605 = vmul.f32 %v597, 0.5
        %v606 = vmul.f32 %v598, 0.5
        %v607 = vadd.f32 %v583, %v599
        %v608 = vadd.f32 %v584, %v600
        %v609 = vadd.f32 %v585, %v601
        %v610 = vadd.f32 %v586, %v602
        %v611 = vadd.f32 %v587, %v603
        %v612 = vadd.f32 %v588, %v604
        %v613 = vadd.f32 %v589, %v605
        %v614 = vadd.f32 %v590, %v606
        %vm615 = vcmp.ge.f32.partialorder %v607, 1.0
        %vm616 = vcmp.ge.f32.partialorder %v608, 1.0
        %vm617 = vcmp.ge.f32.partialorder %v609, 1.0
        %vm618 = vcmp.ge.f32.partialorder %v610, 1.0
        %vm619 = vcmp.ge.f32.partialorder %v611, 1.0
        %vm620 = vcmp.ge.f32.partialorder %v612, 1.0
        %vm621 = vcmp.ge.f32.partialorder %v613, 1.0
        %vm622 = vcmp.ge.f32.partialorder %v614, 1.0
        %v623 = vsel %vm615, 0.0, %v607
        %v624 = vsel %vm616, 0.0, %v608
        %v625 = vsel %vm617, 0.0, %v609
        %v626 = vsel %vm618, 0.0, %v610
        %v627 = vsel %vm619, 0.0, %v611
        %v628 = vsel %vm620, 0.0, %v612
        %v629 = vsel %vm621, 0.0, %v613
        %v630 = vsel %vm622, 0.0, %v614
        %631 = vst [vmem:[#allocation3] sm:$0xff] %v623
        %632 = vst [vmem:[#allocation3 + $0x8] sm:$0xff] %v624
        %633 = vst [vmem:[#allocation3 + $0x10] sm:$0xff] %v625
        %634 = vst [vmem:[#allocation3 + $0x18] sm:$0xff] %v626
        %635 = vst [vmem:[#allocation3 + $0x20] sm:$0xff] %v627
        %636 = vst [vmem:[#allocation3 + $0x28] sm:$0xff] %v628
        %637 = vst [vmem:[#allocation3 + $0x30] sm:$0xff] %v629
        %638 = vst [vmem:[#allocation3 + $0x38] sm:$0xff] %v630
        %v639 = vld [vmem:[%s4] sm:$0xf]
        %v640 = vld [vmem:[%s4 + $0x4] sm:$0xf]
        %v641 = vld [vmem:[%s4 + $0x8] sm:$0xf]
        %v642 = vld [vmem:[%s4 + $0xc] sm:$0xf]
        %v643 = vsel %vm615, 1, 0
        %v644 = vsel %vm616, 1, 0
        %v645 = vsel %vm617, 1, 0
        %v646 = vsel %vm618, 1, 0
        %v647 = vsel %vm619, 1, 0
        %v648 = vsel %vm620, 1, 0
        %v649 = vsel %vm621, 1, 0
        %v650 = vsel %vm622, 1, 0
        %v651 = vcvt.s32.f32 %v643
        %v652 = vcvt.s32.f32 %v644
        %v653 = vcvt.s32.f32 %v645
        %v654 = vcvt.s32.f32 %v646
        %v655 = vcvt.s32.f32 %v647
        %v656 = vcvt.s32.f32 %v648
        %v657 = vcvt.s32.f32 %v649
        %v658 = vcvt.s32.f32 %v650
        %v659 = vpack.c.bf16 %v653, %v651
        %v660 = vpack.c.bf16 %v654, %v652
        %v661 = vpack.c.bf16 %v657, %v655
        %v662 = vpack.c.bf16 %v658, %v656
        %v663 = vld [vmem:[%s5] sm:$0xff]
        %v664 = vld [vmem:[%s5 + $0x8] sm:$0xff]
        %v665 = vld [vmem:[%s5 + $0x10] sm:$0xff]
        %v666 = vld [vmem:[%s5 + $0x18] sm:$0xff]
        %668 = vset.pattern.permute.xlu0 0
        %669 = vperm.xlu0 %668, %v663
        %v670 = vpop.permute.xlu0 %669
        %673 = vset.pattern.permute.xlu0 0
        %674 = vperm.xlu0 %673, %v664
        %v675 = vpop.permute.xlu0 %674
        %678 = vset.pattern.permute.xlu0 0
        %679 = vperm.xlu0 %678, %v665
        %v680 = vpop.permute.xlu0 %679
        %683 = vset.pattern.permute.xlu0 0
        %684 = vperm.xlu0 %683, %v666
        %v685 = vpop.permute.xlu0 %684
        %v691 = vunpack.c.l.b16 %v639
        %v692 = vunpack.c.l.b16 %v640
        %v693 = vunpack.c.l.b16 %v641
        %v694 = vunpack.c.l.b16 %v642
        %v695 = vpack.c.b16 %v692, %v691
        %v696 = vpack.c.b16 %v694, %v693
        %v698 = vsel %vm530, %v695, 0
        %v701 = vsel %vm530, %v696, 0
        %703 = vmatpush.bf16.msra.mxu0 0
        %704 = vmatpush.bf16.msra.mxu0 0
        %705 = vmatpush.bf16.msra.mxu0 0
        %706 = vmatpush.bf16.msra.mxu0 0
        %707 = vmatpush.bf16.msra.mxu0 0
        %708 = vmatpush.bf16.msra.mxu0 0
        %709 = vmatpush.bf16.msra.mxu0 %v661
        %710 = vmatpush.bf16.msra.mxu0 %v659
        %711 = vmatmul.bf16.gmra.mxu0 %v698
        %v712 = vpop.f32.mrf.mxu0
        %v713 = vadd.f32 %v670, %v712
        %v714 = vpop.f32.mrf.mxu0
        %v715 = vadd.f32 %v675, %v714
        %716 = vmatmul.bf16.gmra.mxu0 %v701
        %v717 = vpop.f32.mrf.mxu0
        %v718 = vadd.f32 %v680, %v717
        %v719 = vpop.f32.mrf.mxu0
        %v720 = vadd.f32 %v685, %v719
        %721 = vdwg.mxu0
        %722 = vmatpush.bf16.msra.mxu0 0
        %723 = vmatpush.bf16.msra.mxu0 0
        %724 = vmatpush.bf16.msra.mxu0 0
        %725 = vmatpush.bf16.msra.mxu0 0
        %726 = vmatpush.bf16.msra.mxu0 0
        %727 = vmatpush.bf16.msra.mxu0 0
        %728 = vmatpush.bf16.msra.mxu0 %v662
        %729 = vmatpush.bf16.msra.mxu0 %v660
        %730 = vmatmul.bf16.gmra.mxu0 %v698
        %v731 = vpop.f32.mrf.mxu0
        %v732 = vadd.f32 %v670, %v731
        %v733 = vpop.f32.mrf.mxu0
        %v734 = vadd.f32 %v675, %v733
        %735 = vmatmul.bf16.gmra.mxu0 %v701
        %v736 = vpop.f32.mrf.mxu0
        %v737 = vadd.f32 %v680, %v736
        %v738 = vpop.f32.mrf.mxu0
        %v739 = vadd.f32 %v685, %v738
        %740 = vdwg.mxu0
        %v741 = vld [vmem:[%s343] sm:$0xff]
        %v742 = vld [vmem:[%s343 + $0x8] sm:$0xff]
        %v743 = vld [vmem:[%s343 + $0x10] sm:$0xff]
        %v744 = vld [vmem:[%s343 + $0x18] sm:$0xff]
        %v745 = vunpack.c.l.bf16 %v741
        %v746 = vunpack.c.h.bf16 %v741
        %v747 = vunpack.c.l.bf16 %v742
        %v748 = vunpack.c.h.bf16 %v742
        %v749 = vunpack.c.l.bf16 %v743
        %v750 = vunpack.c.h.bf16 %v743
        %v751 = vunpack.c.l.bf16 %v744
        %v752 = vunpack.c.h.bf16 %v744
        %v753 = vmul.f32 %v713, %v745
        %v754 = vmul.f32 %v732, %v746
        %v755 = vmul.f32 %v715, %v747
        %v756 = vmul.f32 %v734, %v748
        %v757 = vmul.f32 %v718, %v749
        %v758 = vmul.f32 %v737, %v750
        %v759 = vmul.f32 %v720, %v751
        %v760 = vmul.f32 %v739, %v752
        %v761 = vld [vmem:[%s6] sm:$0xff]
        %v762 = vld [vmem:[%s6 + $0x8] sm:$0xff]
        %v763 = vld [vmem:[%s6 + $0x10] sm:$0xff]
        %v764 = vld [vmem:[%s6 + $0x18] sm:$0xff]
        %766 = vset.pattern.permute.xlu0 0
        %767 = vperm.xlu0 %766, %v761
        %v768 = vpop.permute.xlu0 %767
        %771 = vset.pattern.permute.xlu0 0
        %772 = vperm.xlu0 %771, %v762
        %v773 = vpop.permute.xlu0 %772
        %776 = vset.pattern.permute.xlu0 0
        %777 = vperm.xlu0 %776, %v763
        %v778 = vpop.permute.xlu0 %777
        %781 = vset.pattern.permute.xlu0 0
        %782 = vperm.xlu0 %781, %v764
        %v783 = vpop.permute.xlu0 %782
        %v785 = vadd.f32 %v753, %v768
        %v786 = vadd.f32 %v754, %v768
        %v787 = vadd.f32 %v755, %v773
        %v788 = vadd.f32 %v756, %v773
        %v789 = vadd.f32 %v757, %v778
        %v790 = vadd.f32 %v758, %v778
        %v791 = vadd.f32 %v759, %v783
        %v792 = vadd.f32 %v760, %v783
        %793 = vst [vmem:[%s379] sm:$0xff] %v785
        %794 = vst [vmem:[%s379 + $0x8] sm:$0xff] %v786
        %795 = vst [vmem:[%s379 + $0x10] sm:$0xff] %v787
        %796 = vst [vmem:[%s379 + $0x18] sm:$0xff] %v788
        %797 = vst [vmem:[%s379 + $0x20] sm:$0xff] %v789
        %798 = vst [vmem:[%s379 + $0x28] sm:$0xff] %v790
        %799 = vst [vmem:[%s379 + $0x30] sm:$0xff] %v791
        %800 = vst [vmem:[%s379 + $0x38] sm:$0xff] %v792
        %s801 = sand.u32 %s223, 1
        %s802 = scalar_lea.sflag [#allocation6], %s801
        %s803 = sand.u32 %s223, 1
        %s804 = smul.addr %s803, 64
        %s805 = scalar_lea.vmem [#allocation9], %s804
        // Predicated region
        $region61: #{tpu_custom_call.1} parent=47 // pred_check
          %p806 = pneg %p233
        $region62: #{tpu_custom_call.1} parent=47 // pred_check_branch
          %808 = sbr.rel (%p806) target = $region64
        $region63: #{tpu_custom_call.1} parent=47 // pred_region
          %s809 = smul.u32 2, %s33
          %811 = vsyncadd %s802, 0
          %s812 = smul.addr %s32, 8
          %s813 = sadd.s32 %s809, %s812
          %s814 = smul.addr %s34, 16
          %s815 = sadd.s32 %s813, %s814
          %s816 = smul.addr %s815, 8
          %s817 = scalar_lea.hbm %s7, %s816
          %s818 = sshll.u32 %s805, 4
          %s819 = int_to_ptr.vmem [resolvable:$true] %s818
          %s820 = sshll.u32 %s817, 4
          %s821 = int_to_ptr.hbm [resolvable:$true] %s820
          %826 = dma.vmem_to_hbm [thread:$0]  %s819, 1024, %s821, %s802, 256, 256, 16
        $region64: #{tpu_custom_call.1} parent=47 // pred_fallthru
          _
      $region48: #{tpu_custom_call.1} parent=5 // pred_fallthru
        _
      %p827 = scmp.le.s32.totalorder 2, %s22
      // Predicated region
      $region65: #{tpu_custom_call.1} parent=5 // pred_check
        %p828 = pneg %p827
      $region66: #{tpu_custom_call.1} parent=5 // pred_check_branch
        %830 = sbr.rel (%p828) target = $region68
      $region67: #{tpu_custom_call.1} parent=5 // pred_region
        %s831 = ssub.s32 %s22, 2
        // Predicated region
        $region69: #{tpu_custom_call.1} parent=67 // pred_check
          %p832 = pneg %p239
        $region70: #{tpu_custom_call.1} parent=67 // pred_check_branch
          %834 = sbr.rel (%p832) target = $region72
        $region71: #{tpu_custom_call.1} parent=67 // pred_region
          %s835 = sand.u32 %s224, 1
          %s836 = scalar_lea.sflag [#allocation6], %s835
          %s837 = sand.u32 %s224, 1
          %s838 = smul.addr %s837, 64
          %s839 = scalar_lea.vmem [#allocation9], %s838
          %841 = dma.done %s836, 1024
        $region72: #{tpu_custom_call.1} parent=67 // pred_fallthru
          _
      $region68: #{tpu_custom_call.1} parent=5 // pred_fallthru
        _
    $region6: #{tpu_custom_call.1} parent=1 // loop_footer
      %s26 = sadd.s32 1, %s22
    $region7: #{tpu_custom_call.1} parent=1 // loop_footer_branch
      %21 = sbr.rel target = $region3
    $region8: #{tpu_custom_call.1} parent=1 // loop_exit
      _
    %842 = vsyncpa [#allocation5], 1
    %s843 = scalar_lea.sflag [#allocation5], 1
    %844 = vsyncpa %s843, 1
    %845 = vsyncpa [#allocation8], 1
    %s846 = scalar_lea.sflag [#allocation8], 1
    %847 = vsyncpa %s846, 1
    %848 = vsyncpa [#allocation6], 1
    %s849 = scalar_lea.sflag [#allocation6], 1
    %850 = vsyncpa %s849, 1

</llo_original>
